<compile_context>
chip_gen: v7x
topology: tpu7x:2x2x1
jax: 0.10.0
libtpu: 0.0.40
codegen_flags: <defaults>
</compile_context>

<pallas_src>
import functools

import jax
import jax.numpy as jnp
from jax.experimental import pallas as pl
from jax.experimental.pallas import tpu as pltpu


def _round_up(x, m):
    return ((x + m - 1) // m) * m


_TARGET_STEP_BYTES = 4 * 1024 * 1024   # ~2-6 MiB/step is the mem-bound sweet spot


def _dfp_loss_kernel(logits_ref, dist_f_ref, dist_g_ref, tgt_ref, out_ref,
                     acc_ref, *, alpha, beta, gamma, inv_b, batch, tile_rows,
                     steps_per_core):
    step = pl.program_id(1)

    # ---- init: zero the raw (unscaled) partial-sum accumulators ----
    @pl.when(step == 0)
    def _init():
        for i in range(5):
            acc_ref[i] = 0.0

    logits = logits_ref[...].astype(jnp.float32)   # (TB, Cl)
    dist_f = dist_f_ref[...].astype(jnp.float32)   # (TB, Cf)
    dist_g = dist_g_ref[...].astype(jnp.float32)   # (TB, Cg)
    tgt = tgt_ref[...]                             # (TB, 1) int32

    TB, Cl = logits.shape
    _, Cf = dist_f.shape
    _, Cg = dist_g.shape

    # Global row index of every row in this tile.  The last tile may be ragged
    # (and the second core's clamped trailing tile is entirely out of range);
    # out-of-range rows contain unspecified data, so mask the *loaded* values
    # before any arithmetic.
    tile_idx = pl.program_id(0) * steps_per_core + step
    row0 = tile_idx * tile_rows
    row_ids = jax.lax.broadcasted_iota(jnp.int32, (TB, 1), 0) + row0
    row_valid = row_ids < batch                    # (TB, 1) bool
    valid = row_valid.astype(jnp.float32)

    logits = jnp.where(row_valid, logits, 0.0)
    dist_f = jnp.where(row_valid, dist_f, 0.0)
    dist_g = jnp.where(row_valid, dist_g, 0.0)
    tgt = jnp.where(row_valid, tgt, 0)

    # ---- cross entropy partial sum (numerically stable LSE) ----
    row_max = jnp.max(logits, axis=1, keepdims=True)                     # (TB, 1)
    lse = jnp.log(jnp.sum(jnp.exp(logits - row_max),
                          axis=1, keepdims=True)) + row_max              # (TB, 1)
    iota_l = jax.lax.broadcasted_iota(jnp.int32, (TB, Cl), 1)
    onehot_l = iota_l == tgt                                             # (TB, Cl)
    logit_at_t = jnp.sum(jnp.where(onehot_l, logits, 0.0),
                         axis=1, keepdims=True)                          # (TB, 1)
    ce_sum = jnp.sum((lse - logit_at_t) * valid)

    # ---- dist_fea2cen partial sums (reuse one-hot mask when Cf == Cl) ----
    if Cf == Cl:
        onehot_f = onehot_l
    else:
        iota_f = jax.lax.broadcasted_iota(jnp.int32, (TB, Cf), 1)
        onehot_f = iota_f == tgt
    within_f = jnp.sum(jnp.where(onehot_f, dist_f, 0.0),
                       axis=1, keepdims=True)                            # (TB, 1)
    between_f = jnp.sum(jnp.maximum(within_f - dist_f, 0.0),
                        axis=1, keepdims=True)                           # (TB, 1)
    within_f_sum = jnp.sum(within_f * valid)
    between_f_sum = jnp.sum(between_f * valid)

    # ---- dist_gen2cen partial sums ('within' column is the last class) ----
    within_g = dist_g[:, Cg - 1:Cg]                                      # static slice
    between_g = jnp.sum(jnp.maximum(within_g - dist_g, 0.0),
                        axis=1, keepdims=True)                           # (TB, 1)
    within_g_sum = jnp.sum(within_g * valid)
    between_g_sum = jnp.sum(between_g * valid)

    acc_ref[0] += ce_sum
    acc_ref[1] += within_f_sum
    acc_ref[2] += between_f_sum
    acc_ref[3] += within_g_sum
    acc_ref[4] += between_g_sum

    # ---- finalize: apply 1/B, alpha/beta/gamma, (C-1) normalizers once ----
    @pl.when(step == pl.num_programs(1) - 1)
    def _finalize():
        ce = acc_ref[0] * inv_b
        lw = alpha * acc_ref[1] * inv_b
        lb = beta * acc_ref[2] * (inv_b / (Cf - 1.0))
        gw = gamma * alpha * acc_ref[3] * inv_b
        gb = gamma * beta * acc_ref[4] * (inv_b / (Cg - 1.0))
        total = ce + lw + lb + gw + gb
        # Lane-dense per-core output tile: sublane r holds result r (broadcast
        # over lanes); wrapper reads lane 0 of rows 0..5 and sums over cores.
        row = jax.lax.broadcasted_iota(jnp.int32, (8, 128), 0)
        out_ref[0] = (jnp.where(row == 0, total, 0.0)
                      + jnp.where(row == 1, ce, 0.0)
                      + jnp.where(row == 2, lw, 0.0)
                      + jnp.where(row == 3, lb, 0.0)
                      + jnp.where(row == 4, gw, 0.0)
                      + jnp.where(row == 5, gb, 0.0))


def dfp_loss(net_out, targets, alpha=1.0, beta=1.0, gamma=1.0,
             block_rows=None, vmem_limit_bytes=None):
    """Pallas implementation of DFPLoss.forward.

    net_out: dict with 'logits' (B, Cl), 'dist_fea2cen' (B, Cf),
             'dist_gen2cen' (B, Cg) float arrays (f32 or bf16).
    targets: (B,) int class labels in [0, Cl).
    """
    logits = net_out['logits']
    dist_f = net_out['dist_fea2cen']
    dist_g = net_out['dist_gen2cen']

    B, Cl = logits.shape
    _, Cf = dist_f.shape
    _, Cg = dist_g.shape

    # ---- generation-aware VMEM budget ----
    try:
        vmem_cap = int(pltpu.get_tpu_info().vmem_capacity_bytes)
    except Exception:
        vmem_cap = 64 * 1024 * 1024          # conservative: v7x per-TensorCore VMEM
    if vmem_limit_bytes is None:
        vmem_limit_bytes = min(vmem_cap // 2, 48 * 1024 * 1024)

    # ---- lane/sublane-padding-aware per-row VMEM footprint ----
    itemsizes = [jnp.dtype(a.dtype).itemsize for a in (logits, dist_f, dist_g)]
    rows_mult = 16 if min(itemsizes) < 4 else 8      # bf16 packs 2 rows / sublane
    bytes_per_row = sum(it * _round_up(c, 128)
                        for it, c in zip(itemsizes, (Cl, Cf, Cg)))
    bytes_per_row += 4 * 128                         # (tb,1) int32 target tile lane-pads

    if block_rows is None:
        # double-buffered inputs stay well inside the scoped-VMEM budget
        step_budget = min(_TARGET_STEP_BYTES, (vmem_limit_bytes * 3) // 8)
        tb = max(rows_mult,
                 (step_budget // bytes_per_row) // rows_mult * rows_mult)
    else:
        tb = max(rows_mult, _round_up(int(block_rows), rows_mult))
    if tb >= B:
        tb = B                # single exact block (full-array dims; no ragged edge)

    n_tiles = pl.cdiv(B, tb)
    num_cores = 2 if n_tiles >= 2 else 1   # TC split on v7x/v5p; harmless loop on 1-TC
    spc = pl.cdiv(n_tiles, num_cores)      # grid steps per core

    def idx(c, i):
        # Clamp the second core's possible trailing out-of-range tile onto the
        # last real tile; its rows are fully masked out inside the kernel.
        return (jnp.minimum(c * spc + i, n_tiles - 1), 0)

    tgt_col = targets.astype(jnp.int32).reshape(-1, 1)

    kernel = functools.partial(
        _dfp_loss_kernel,
        alpha=float(alpha), beta=float(beta), gamma=float(gamma),
        inv_b=1.0 / float(B), batch=int(B), tile_rows=int(tb),
        steps_per_core=int(spc))

    out = pl.pallas_call(
        kernel,
        out_shape=jax.ShapeDtypeStruct((num_cores, 8, 128), jnp.float32),
        grid_spec=pltpu.PrefetchScalarGridSpec(
            num_scalar_prefetch=0,
            grid=(num_cores, spc),
            in_specs=[
                pl.BlockSpec((tb, Cl), idx),      # logits
                pl.BlockSpec((tb, Cf), idx),      # dist_fea2cen
                pl.BlockSpec((tb, Cg), idx),      # dist_gen2cen
                pl.BlockSpec((tb, 1), idx),       # targets column
            ],
            out_specs=pl.BlockSpec((1, 8, 128), lambda c, i: (c, 0, 0)),
            scratch_shapes=[pltpu.SMEM((8,), jnp.float32)],
        ),
        compiler_params=pltpu.CompilerParams(
            dimension_semantics=("parallel", "arbitrary"),
            vmem_limit_bytes=int(vmem_limit_bytes)),
    )(logits, dist_f, dist_g, tgt_col)

    vals = jnp.sum(out[:, :6, 0], axis=0)    # sum the per-core partial results
    return {
        'total': vals[0],
        'classify': vals[1],
        'within': vals[2],
        'between': vals[3],
        'gen_within': vals[4],
        'gen_between': vals[5],
    }


def _reference_dfp_loss(net_out, targets, alpha=1.0, beta=1.0, gamma=1.0):
    """Pure-JAX reference mirroring the PyTorch module, for verification."""
    logits = net_out['logits'].astype(jnp.float32)
    t = targets.astype(jnp.int32)
    B, _ = logits.shape
    logz = jax.nn.logsumexp(logits, axis=1)
    ce = jnp.mean(logz - logits[jnp.arange(B), t])

    d = net_out['dist_fea2cen'].astype(jnp.float32)
    _, Cf = d.shape
    mask = jax.nn.one_hot(t, Cf, dtype=jnp.float32)
    dw = jnp.sum(d * mask, axis=1, keepdims=True)
    db = jnp.sum(jax.nn.relu(dw - d), axis=1) / (Cf - 1.0)
    loss_within = alpha * jnp.sum(dw) / B
    loss_between = beta * jnp.sum(db) / B

    g = net_out['dist_gen2cen'].astype(jnp.float32)
    _, Cg = g.shape
    dwg = g[:, Cg - 1:Cg]
    dbg = jnp.sum(jax.nn.relu(dwg - g), axis=1) / (Cg - 1.0)
    loss_gw = gamma * alpha * jnp.sum(dwg) / B
    loss_gb = gamma * beta * jnp.sum(dbg) / B

    total = ce + loss_within + loss_between + loss_gw + loss_gb
    return {'total': total, 'classify': ce, 'within': loss_within,
            'between': loss_between, 'gen_within': loss_gw,
            'gen_between': loss_gb}


if __name__ == "__main__":
    key = jax.random.PRNGKey(0)

    def make_inputs(k, batch, num_known):
        num_gen = num_known + 1
        k1, k2, k3, k4 = jax.random.split(k, 4)
        net_out = {
            'logits': jax.random.normal(k1, (batch, num_known), dtype=jnp.float32),
            'dist_fea2cen': jnp.abs(jax.random.normal(k2, (batch, num_known),
                                                      dtype=jnp.float32)),
            'dist_gen2cen': jnp.abs(jax.random.normal(k3, (batch, num_gen),
                                                      dtype=jnp.float32)),
        }
        tgt = jax.random.randint(k4, (batch,), 0, num_known, dtype=jnp.int32)
        return net_out, tgt

    k_a, k_b = jax.random.split(key)

    # (a) batch 30, classes 6/7, forced 8-row tiles -> grid (2 cores, 2 steps),
    #     ragged last tile (rows 30,31 masked in-kernel; no jnp.pad copy).
    net_out, targets = make_inputs(k_a, 30, 6)
    ref = _reference_dfp_loss(net_out, targets)
    res_tiled = dfp_loss(net_out, targets, block_rows=8)
    res_tiled = jax.tree_util.tree_map(jax.block_until_ready, res_tiled)
    for k in ref:
        assert jnp.allclose(res_tiled[k], ref[k], rtol=1e-5, atol=1e-5), (
            "tiled", k, res_tiled[k], ref[k])

    # (b) same inputs, auto-sized tile (single exact full-batch block).
    res_auto = dfp_loss(net_out, targets)
    res_auto = jax.tree_util.tree_map(jax.block_until_ready, res_auto)
    for k in ref:
        assert jnp.allclose(res_auto[k], ref[k], rtol=1e-5, atol=1e-5), (
            "auto", k, res_auto[k], ref[k])

    # (c) batch 44 with 16-row tiles -> 3 real tiles over 2 cores; the second
    #     core's trailing tile is the clamped, fully-masked duplicate.
    net_out2, targets2 = make_inputs(k_b, 44, 6)
    ref2 = _reference_dfp_loss(net_out2, targets2, alpha=0.5, beta=2.0, gamma=1.5)
    res_odd = dfp_loss(net_out2, targets2, alpha=0.5, beta=2.0, gamma=1.5,
                       block_rows=16)
    res_odd = jax.tree_util.tree_map(jax.block_until_ready, res_odd)
    for k in ref2:
        assert jnp.allclose(res_odd[k], ref2[k], rtol=1e-5, atol=1e-5), (
            "odd", k, res_odd[k], ref2[k])

    print("KERNEL_OK")
</pallas_src>

<mosaic_0001>
module attributes {stable_mosaic.version = 11 : i64} {
  func.func @_dfp_loss_kernel(%arg0: i32, %arg1: i32, %arg2: memref<8x6xf32, #tpu.memory_space<vmem>>, %arg3: memref<8x6xf32, #tpu.memory_space<vmem>>, %arg4: memref<8x7xf32, #tpu.memory_space<vmem>>, %arg5: memref<8x1xi32, #tpu.memory_space<vmem>>, %arg6: memref<1x8x128xf32, #tpu.memory_space<vmem>>, %arg7: memref<8xf32, #tpu.memory_space<smem>>) attributes {dimension_semantics = [#tpu.dimension_semantics<parallel>, #tpu.dimension_semantics<arbitrary>], iteration_bounds = array<i64: 2, 2>, scalar_prefetch = 0 : i64, scratch_operands = 1 : i64, tpu.core_type = #tpu.core_type<tc>, window_params = [{transform_indices = @transform_0, window_bounds = array<i64: 8, 6>}, {transform_indices = @transform_1, window_bounds = array<i64: 8, 6>}, {transform_indices = @transform_2, window_bounds = array<i64: 8, 7>}, {transform_indices = @transform_3, window_bounds = array<i64: 8, 1>}, {transform_indices = @transform_4, window_bounds = array<i64: 1, 8, 128>}]} {
    %c0_i32 = arith.constant 0 : i32
    %0 = arith.cmpi eq, %arg1, %c0_i32 : i32
    %1 = arith.extui %0 : i1 to i32
    %c0_i32_0 = arith.constant 0 : i32
    %2 = arith.cmpi ne, %1, %c0_i32_0 : i32
    scf.if %2 {
      %cst_33 = arith.constant 0.000000e+00 : f32
      %c0_34 = arith.constant 0 : index
      %108 = memref.load %arg7[%c0_34] : memref<8xf32, #tpu.memory_space<smem>>
      memref.store %cst_33, %arg7[%c0_34] : memref<8xf32, #tpu.memory_space<smem>>
      %cst_35 = arith.constant 0.000000e+00 : f32
      %c1_36 = arith.constant 1 : index
      %109 = memref.load %arg7[%c1_36] : memref<8xf32, #tpu.memory_space<smem>>
      memref.store %cst_35, %arg7[%c1_36] : memref<8xf32, #tpu.memory_space<smem>>
      %cst_37 = arith.constant 0.000000e+00 : f32
      %c2_38 = arith.constant 2 : index
      %110 = memref.load %arg7[%c2_38] : memref<8xf32, #tpu.memory_space<smem>>
      memref.store %cst_37, %arg7[%c2_38] : memref<8xf32, #tpu.memory_space<smem>>
      %cst_39 = arith.constant 0.000000e+00 : f32
      %c3_40 = arith.constant 3 : index
      %111 = memref.load %arg7[%c3_40] : memref<8xf32, #tpu.memory_space<smem>>
      memref.store %cst_39, %arg7[%c3_40] : memref<8xf32, #tpu.memory_space<smem>>
      %cst_41 = arith.constant 0.000000e+00 : f32
      %c4_42 = arith.constant 4 : index
      %112 = memref.load %arg7[%c4_42] : memref<8xf32, #tpu.memory_space<smem>>
      memref.store %cst_41, %arg7[%c4_42] : memref<8xf32, #tpu.memory_space<smem>>
    } else {
    }
    %c0 = arith.constant 0 : index
    %c0_1 = arith.constant 0 : index
    %3 = vector.load %arg2[%c0, %c0_1] : memref<8x6xf32, #tpu.memory_space<vmem>>, vector<8x6xf32>
    %c0_2 = arith.constant 0 : index
    %c0_3 = arith.constant 0 : index
    %4 = vector.load %arg3[%c0_2, %c0_3] : memref<8x6xf32, #tpu.memory_space<vmem>>, vector<8x6xf32>
    %c0_4 = arith.constant 0 : index
    %c0_5 = arith.constant 0 : index
    %5 = vector.load %arg4[%c0_4, %c0_5] : memref<8x7xf32, #tpu.memory_space<vmem>>, vector<8x7xf32>
    %c0_6 = arith.constant 0 : index
    %c0_7 = arith.constant 0 : index
    %6 = vector.load %arg5[%c0_6, %c0_7] : memref<8x1xi32, #tpu.memory_space<vmem>>, vector<8x1xi32>
    %c2_i32 = arith.constant 2 : i32
    %7 = arith.muli %arg0, %c2_i32 : i32
    %8 = arith.addi %7, %arg1 : i32
    %c8_i32 = arith.constant 8 : i32
    %9 = arith.muli %8, %c8_i32 : i32
    %10 = tpu.iota {dimensions = array<i32: 0>} : vector<8x1xi32>
    %11 = vector.broadcast %9 : i32 to vector<8x1xi32>
    %12 = arith.addi %10, %11 : vector<8x1xi32>
    %c30_i32 = arith.constant 30 : i32
    %13 = vector.broadcast %c30_i32 : i32 to vector<8x1xi32>
    %14 = arith.cmpi slt, %12, %13 : vector<8x1xi32>
    %15 = arith.extui %14 : vector<8x1xi1> to vector<8x1xi32>
    %16 = arith.sitofp %15 : vector<8x1xi32> to vector<8x1xf32>
    %cst = arith.constant 0.000000e+00 : f32
    %17 = vector.shape_cast %14 : vector<8x1xi1> to vector<8x1xi1>
    %18 = vector.broadcast %17 : vector<8x1xi1> to vector<8x6xi1>
    %19 = vector.broadcast %cst : f32 to vector<8x6xf32>
    %20 = arith.select %18, %3, %19 : vector<8x6xi1>, vector<8x6xf32>
    %cst_8 = arith.constant 0.000000e+00 : f32
    %21 = vector.shape_cast %14 : vector<8x1xi1> to vector<8x1xi1>
    %22 = vector.broadcast %21 : vector<8x1xi1> to vector<8x6xi1>
    %23 = vector.broadcast %cst_8 : f32 to vector<8x6xf32>
    %24 = arith.select %22, %4, %23 : vector<8x6xi1>, vector<8x6xf32>
    %cst_9 = arith.constant 0.000000e+00 : f32
    %25 = vector.shape_cast %14 : vector<8x1xi1> to vector<8x1xi1>
    %26 = vector.broadcast %25 : vector<8x1xi1> to vector<8x7xi1>
    %27 = vector.broadcast %cst_9 : f32 to vector<8x7xf32>
    %28 = arith.select %26, %5, %27 : vector<8x7xi1>, vector<8x7xf32>
    %c0_i32_10 = arith.constant 0 : i32
    %29 = vector.broadcast %c0_i32_10 : i32 to vector<8x1xi32>
    %30 = arith.select %14, %6, %29 : vector<8x1xi1>, vector<8x1xi32>
    %cst_11 = arith.constant dense<0xFF800000> : vector<8xf32>
    %31 = vector.multi_reduction <maximumf>, %20, %cst_11 [1] : vector<8x6xf32> to vector<8xf32>
    %32 = vector.shape_cast %31 : vector<8xf32> to vector<8x1xf32>
    %33 = vector.broadcast %32 : vector<8x1xf32> to vector<8x6xf32>
    %34 = arith.subf %20, %33 : vector<8x6xf32>
    %35 = math.exp %34 : vector<8x6xf32>
    %cst_12 = arith.constant dense<0.000000e+00> : vector<8xf32>
    %36 = vector.multi_reduction <add>, %35, %cst_12 [1] : vector<8x6xf32> to vector<8xf32>
    %37 = vector.shape_cast %36 : vector<8xf32> to vector<8x1xf32>
    %38 = math.log %37 : vector<8x1xf32>
    %39 = arith.addf %38, %32 : vector<8x1xf32>
    %40 = tpu.iota {dimensions = array<i32: 1>} : vector<8x6xi32>
    %41 = vector.broadcast %30 : vector<8x1xi32> to vector<8x6xi32>
    %42 = arith.cmpi eq, %40, %41 : vector<8x6xi32>
    %cst_13 = arith.constant 0.000000e+00 : f32
    %43 = vector.broadcast %cst_13 : f32 to vector<8x6xf32>
    %44 = arith.select %42, %20, %43 : vector<8x6xi1>, vector<8x6xf32>
    %cst_14 = arith.constant dense<0.000000e+00> : vector<8xf32>
    %45 = vector.multi_reduction <add>, %44, %cst_14 [1] : vector<8x6xf32> to vector<8xf32>
    %46 = vector.shape_cast %45 : vector<8xf32> to vector<8x1xf32>
    %47 = arith.subf %39, %46 : vector<8x1xf32>
    %48 = arith.mulf %47, %16 : vector<8x1xf32>
    %49 = vector.shape_cast %48 : vector<8x1xf32> to vector<1x8x1xf32>
    %cst_15 = arith.constant dense<0.000000e+00> : vector<1xf32>
    %50 = vector.multi_reduction <add>, %49, %cst_15 [1, 2] : vector<1x8x1xf32> to vector<1xf32>
    %51 = vector.shape_cast %50 : vector<1xf32> to vector<1x1x1xf32>
    %52 = vector.extract %51[0, 0, 0] : f32 from vector<1x1x1xf32>
    %cst_16 = arith.constant 0.000000e+00 : f32
    %53 = vector.broadcast %cst_16 : f32 to vector<8x6xf32>
    %54 = arith.select %42, %24, %53 : vector<8x6xi1>, vector<8x6xf32>
    %cst_17 = arith.constant dense<0.000000e+00> : vector<8xf32>
    %55 = vector.multi_reduction <add>, %54, %cst_17 [1] : vector<8x6xf32> to vector<8xf32>
    %56 = vector.shape_cast %55 : vector<8xf32> to vector<8x1xf32>
    %57 = vector.broadcast %56 : vector<8x1xf32> to vector<8x6xf32>
    %58 = arith.subf %57, %24 : vector<8x6xf32>
    %cst_18 = arith.constant 0.000000e+00 : f32
    %59 = vector.broadcast %cst_18 : f32 to vector<8x6xf32>
    %60 = arith.maximumf %58, %59 : vector<8x6xf32>
    %cst_19 = arith.constant dense<0.000000e+00> : vector<8xf32>
    %61 = vector.multi_reduction <add>, %60, %cst_19 [1] : vector<8x6xf32> to vector<8xf32>
    %62 = vector.shape_cast %61 : vector<8xf32> to vector<8x1xf32>
    %63 = arith.mulf %56, %16 : vector<8x1xf32>
    %64 = vector.shape_cast %63 : vector<8x1xf32> to vector<1x8x1xf32>
    %cst_20 = arith.constant dense<0.000000e+00> : vector<1xf32>
    %65 = vector.multi_reduction <add>, %64, %cst_20 [1, 2] : vector<1x8x1xf32> to vector<1xf32>
    %66 = vector.shape_cast %65 : vector<1xf32> to vector<1x1x1xf32>
    %67 = vector.extract %66[0, 0, 0] : f32 from vector<1x1x1xf32>
    %68 = arith.mulf %62, %16 : vector<8x1xf32>
    %69 = vector.shape_cast %68 : vector<8x1xf32> to vector<1x8x1xf32>
    %cst_21 = arith.constant dense<0.000000e+00> : vector<1xf32>
    %70 = vector.multi_reduction <add>, %69, %cst_21 [1, 2] : vector<1x8x1xf32> to vector<1xf32>
    %71 = vector.shape_cast %70 : vector<1xf32> to vector<1x1x1xf32>
    %72 = vector.extract %71[0, 0, 0] : f32 from vector<1x1x1xf32>
    %73 = vector.extract_strided_slice %28 {offsets = [0, 6], sizes = [8, 1], strides = [1, 1]} : vector<8x7xf32> to vector<8x1xf32>
    %74 = vector.broadcast %73 : vector<8x1xf32> to vector<8x7xf32>
    %75 = arith.subf %74, %28 : vector<8x7xf32>
    %cst_22 = arith.constant 0.000000e+00 : f32
    %76 = vector.broadcast %cst_22 : f32 to vector<8x7xf32>
    %77 = arith.maximumf %75, %76 : vector<8x7xf32>
    %cst_23 = arith.constant dense<0.000000e+00> : vector<8xf32>
    %78 = vector.multi_reduction <add>, %77, %cst_23 [1] : vector<8x7xf32> to vector<8xf32>
    %79 = vector.shape_cast %78 : vector<8xf32> to vector<8x1xf32>
    %80 = arith.mulf %73, %16 : vector<8x1xf32>
    %81 = vector.shape_cast %80 : vector<8x1xf32> to vector<1x8x1xf32>
    %cst_24 = arith.constant dense<0.000000e+00> : vector<1xf32>
    %82 = vector.multi_reduction <add>, %81, %cst_24 [1, 2] : vector<1x8x1xf32> to vector<1xf32>
    %83 = vector.shape_cast %82 : vector<1xf32> to vector<1x1x1xf32>
    %84 = vector.extract %83[0, 0, 0] : f32 from vector<1x1x1xf32>
    %85 = arith.mulf %79, %16 : vector<8x1xf32>
    %86 = vector.shape_cast %85 : vector<8x1xf32> to vector<1x8x1xf32>
    %cst_25 = arith.constant dense<0.000000e+00> : vector<1xf32>
    %87 = vector.multi_reduction <add>, %86, %cst_25 [1, 2] : vector<1x8x1xf32> to vector<1xf32>
    %88 = vector.shape_cast %87 : vector<1xf32> to vector<1x1x1xf32>
    %89 = vector.extract %88[0, 0, 0] : f32 from vector<1x1x1xf32>
    %c0_26 = arith.constant 0 : index
    %90 = memref.load %arg7[%c0_26] : memref<8xf32, #tpu.memory_space<smem>>
    %91 = arith.addf %90, %52 : f32
    %c0_27 = arith.constant 0 : index
    %92 = memref.load %arg7[%c0_27] : memref<8xf32, #tpu.memory_space<smem>>
    memref.store %91, %arg7[%c0_27] : memref<8xf32, #tpu.memory_space<smem>>
    %c1 = arith.constant 1 : index
    %93 = memref.load %arg7[%c1] : memref<8xf32, #tpu.memory_space<smem>>
    %94 = arith.addf %93, %67 : f32
    %c1_28 = arith.constant 1 : index
    %95 = memref.load %arg7[%c1_28] : memref<8xf32, #tpu.memory_space<smem>>
    memref.store %94, %arg7[%c1_28] : memref<8xf32, #tpu.memory_space<smem>>
    %c2 = arith.constant 2 : index
    %96 = memref.load %arg7[%c2] : memref<8xf32, #tpu.memory_space<smem>>
    %97 = arith.addf %96, %72 : f32
    %c2_29 = arith.constant 2 : index
    %98 = memref.load %arg7[%c2_29] : memref<8xf32, #tpu.memory_space<smem>>
    memref.store %97, %arg7[%c2_29] : memref<8xf32, #tpu.memory_space<smem>>
    %c3 = arith.constant 3 : index
    %99 = memref.load %arg7[%c3] : memref<8xf32, #tpu.memory_space<smem>>
    %100 = arith.addf %99, %84 : f32
    %c3_30 = arith.constant 3 : index
    %101 = memref.load %arg7[%c3_30] : memref<8xf32, #tpu.memory_space<smem>>
    memref.store %100, %arg7[%c3_30] : memref<8xf32, #tpu.memory_space<smem>>
    %c4 = arith.constant 4 : index
    %102 = memref.load %arg7[%c4] : memref<8xf32, #tpu.memory_space<smem>>
    %103 = arith.addf %102, %89 : f32
    %c4_31 = arith.constant 4 : index
    %104 = memref.load %arg7[%c4_31] : memref<8xf32, #tpu.memory_space<smem>>
    memref.store %103, %arg7[%c4_31] : memref<8xf32, #tpu.memory_space<smem>>
    %c1_i32 = arith.constant 1 : i32
    %105 = arith.cmpi eq, %arg1, %c1_i32 : i32
    %106 = arith.extui %105 : i1 to i32
    %c0_i32_32 = arith.constant 0 : i32
    %107 = arith.cmpi ne, %106, %c0_i32_32 : i32
    scf.if %107 {
      %c0_33 = arith.constant 0 : index
      %108 = memref.load %arg7[%c0_33] : memref<8xf32, #tpu.memory_space<smem>>
      %cst_34 = arith.constant 0.0333333351 : f32
      %109 = arith.mulf %108, %cst_34 : f32
      %c1_35 = arith.constant 1 : index
      %110 = memref.load %arg7[%c1_35] : memref<8xf32, #tpu.memory_space<smem>>
      %cst_36 = arith.constant 1.000000e+00 : f32
      %111 = arith.mulf %cst_36, %110 : f32
      %cst_37 = arith.constant 0.0333333351 : f32
      %112 = arith.mulf %111, %cst_37 : f32
      %c2_38 = arith.constant 2 : index
      %113 = memref.load %arg7[%c2_38] : memref<8xf32, #tpu.memory_space<smem>>
      %cst_39 = arith.constant 1.000000e+00 : f32
      %114 = arith.mulf %cst_39, %113 : f32
      %cst_40 = arith.constant 0.00666666683 : f32
      %115 = arith.mulf %114, %cst_40 : f32
      %c3_41 = arith.constant 3 : index
      %116 = memref.load %arg7[%c3_41] : memref<8xf32, #tpu.memory_space<smem>>
      %cst_42 = arith.constant 1.000000e+00 : f32
      %117 = arith.mulf %cst_42, %116 : f32
      %cst_43 = arith.constant 0.0333333351 : f32
      %118 = arith.mulf %117, %cst_43 : f32
      %c4_44 = arith.constant 4 : index
      %119 = memref.load %arg7[%c4_44] : memref<8xf32, #tpu.memory_space<smem>>
      %cst_45 = arith.constant 1.000000e+00 : f32
      %120 = arith.mulf %cst_45, %119 : f32
      %cst_46 = arith.constant 0.00555555569 : f32
      %121 = arith.mulf %120, %cst_46 : f32
      %122 = arith.addf %109, %112 : f32
      %123 = arith.addf %122, %115 : f32
      %124 = arith.addf %123, %118 : f32
      %125 = arith.addf %124, %121 : f32
      %126 = tpu.iota {dimensions = array<i32: 0>} : vector<8x128xi32>
      %c0_i32_47 = arith.constant 0 : i32
      %127 = vector.broadcast %c0_i32_47 : i32 to vector<8x128xi32>
      %128 = arith.cmpi eq, %126, %127 : vector<8x128xi32>
      %cst_48 = arith.constant 0.000000e+00 : f32
      %129 = vector.broadcast %125 : f32 to vector<8x128xf32>
      %130 = vector.broadcast %cst_48 : f32 to vector<8x128xf32>
      %131 = arith.select %128, %129, %130 : vector<8x128xi1>, vector<8x128xf32>
      %c1_i32_49 = arith.constant 1 : i32
      %132 = vector.broadcast %c1_i32_49 : i32 to vector<8x128xi32>
      %133 = arith.cmpi eq, %126, %132 : vector<8x128xi32>
      %cst_50 = arith.constant 0.000000e+00 : f32
      %134 = vector.broadcast %109 : f32 to vector<8x128xf32>
      %135 = vector.broadcast %cst_50 : f32 to vector<8x128xf32>
      %136 = arith.select %133, %134, %135 : vector<8x128xi1>, vector<8x128xf32>
      %137 = arith.addf %131, %136 : vector<8x128xf32>
      %c2_i32_51 = arith.constant 2 : i32
      %138 = vector.broadcast %c2_i32_51 : i32 to vector<8x128xi32>
      %139 = arith.cmpi eq, %126, %138 : vector<8x128xi32>
      %cst_52 = arith.constant 0.000000e+00 : f32
      %140 = vector.broadcast %112 : f32 to vector<8x128xf32>
      %141 = vector.broadcast %cst_52 : f32 to vector<8x128xf32>
      %142 = arith.select %139, %140, %141 : vector<8x128xi1>, vector<8x128xf32>
      %143 = arith.addf %137, %142 : vector<8x128xf32>
      %c3_i32 = arith.constant 3 : i32
      %144 = vector.broadcast %c3_i32 : i32 to vector<8x128xi32>
      %145 = arith.cmpi eq, %126, %144 : vector<8x128xi32>
      %cst_53 = arith.constant 0.000000e+00 : f32
      %146 = vector.broadcast %115 : f32 to vector<8x128xf32>
      %147 = vector.broadcast %cst_53 : f32 to vector<8x128xf32>
      %148 = arith.select %145, %146, %147 : vector<8x128xi1>, vector<8x128xf32>
      %149 = arith.addf %143, %148 : vector<8x128xf32>
      %c4_i32 = arith.constant 4 : i32
      %150 = vector.broadcast %c4_i32 : i32 to vector<8x128xi32>
      %151 = arith.cmpi eq, %126, %150 : vector<8x128xi32>
      %cst_54 = arith.constant 0.000000e+00 : f32
      %152 = vector.broadcast %118 : f32 to vector<8x128xf32>
      %153 = vector.broadcast %cst_54 : f32 to vector<8x128xf32>
      %154 = arith.select %151, %152, %153 : vector<8x128xi1>, vector<8x128xf32>
      %155 = arith.addf %149, %154 : vector<8x128xf32>
      %c5_i32 = arith.constant 5 : i32
      %156 = vector.broadcast %c5_i32 : i32 to vector<8x128xi32>
      %157 = arith.cmpi eq, %126, %156 : vector<8x128xi32>
      %cst_55 = arith.constant 0.000000e+00 : f32
      %158 = vector.broadcast %121 : f32 to vector<8x128xf32>
      %159 = vector.broadcast %cst_55 : f32 to vector<8x128xf32>
      %160 = arith.select %157, %158, %159 : vector<8x128xi1>, vector<8x128xf32>
      %161 = arith.addf %155, %160 : vector<8x128xf32>
      %c0_56 = arith.constant 0 : index
      %c0_57 = arith.constant 0 : index
      %c0_58 = arith.constant 0 : index
      %162 = vector.load %arg6[%c0_56, %c0_57, %c0_58] : memref<1x8x128xf32, #tpu.memory_space<vmem>>, vector<1x8x128xf32>
      %163 = vector.shape_cast %162 : vector<1x8x128xf32> to vector<8x128xf32>
      %164 = vector.shape_cast %161 : vector<8x128xf32> to vector<1x8x128xf32>
      tpu.vector_store %arg6[%c0_56, %c0_57, %c0_58], %164 {strides = array<i32>} : memref<1x8x128xf32, #tpu.memory_space<vmem>>, vector<1x8x128xf32>,
    } else {
    }
    return
  }
  func.func @transform_0(%arg0: i32, %arg1: i32) -> (i32, i32) {
    %c2_i32 = arith.constant 2 : i32
    %0 = arith.muli %arg0, %c2_i32 : i32
    %1 = arith.addi %0, %arg1 : i32
    %c3_i32 = arith.constant 3 : i32
    %2 = arith.minsi %1, %c3_i32 : i32
    %c0_i32 = arith.constant 0 : i32
    %c0_i32_0 = arith.constant 0 : i32
    return %2, %c0_i32 : i32, i32
  }
  func.func @transform_1(%arg0: i32, %arg1: i32) -> (i32, i32) {
    %c2_i32 = arith.constant 2 : i32
    %0 = arith.muli %arg0, %c2_i32 : i32
    %1 = arith.addi %0, %arg1 : i32
    %c3_i32 = arith.constant 3 : i32
    %2 = arith.minsi %1, %c3_i32 : i32
    %c0_i32 = arith.constant 0 : i32
    %c0_i32_0 = arith.constant 0 : i32
    return %2, %c0_i32 : i32, i32
  }
  func.func @transform_2(%arg0: i32, %arg1: i32) -> (i32, i32) {
    %c2_i32 = arith.constant 2 : i32
    %0 = arith.muli %arg0, %c2_i32 : i32
    %1 = arith.addi %0, %arg1 : i32
    %c3_i32 = arith.constant 3 : i32
    %2 = arith.minsi %1, %c3_i32 : i32
    %c0_i32 = arith.constant 0 : i32
    %c0_i32_0 = arith.constant 0 : i32
    return %2, %c0_i32 : i32, i32
  }
  func.func @transform_3(%arg0: i32, %arg1: i32) -> (i32, i32) {
    %c2_i32 = arith.constant 2 : i32
    %0 = arith.muli %arg0, %c2_i32 : i32
    %1 = arith.addi %0, %arg1 : i32
    %c3_i32 = arith.constant 3 : i32
    %2 = arith.minsi %1, %c3_i32 : i32
    %c0_i32 = arith.constant 0 : i32
    %c0_i32_0 = arith.constant 0 : i32
    return %2, %c0_i32 : i32, i32
  }
  func.func @transform_4(%arg0: i32, %arg1: i32) -> (i32, i32, i32) {
    %c0_i32 = arith.constant 0 : i32
    %c0_i32_0 = arith.constant 0 : i32
    %c0_i32_1 = arith.constant 0 : i32
    return %arg0, %c0_i32, %c0_i32_0 : i32, i32, i32
  }
}

</mosaic_0001>

<llo_original>
// kernel: tpu_custom_call.1
$region0: #{tpu_custom_call.1}
  #allocation0 [shape = 'u32[]', space=smem, size = 0x4, offset = 0x4, fixed_abs, tag = 'smem constant byte address 0x4 - core index']
  #allocation1 [shape = 'u32[144,128]{1,0:T(1,128)}', space=vmem, size = 0x12000, scoped, tag = 'internal scratch']
  #allocation2 [shape = 'f32[8]{0:T(128)}', space=smem, size = 0x200, scoped, tag = 'scratch operand']
  %s0 = inlined_call_operand.vmem [shape: f32[30,6], index: 0, kind: input, shape index: {}]
  %s1 = inlined_call_operand.vmem [shape: f32[30,6], index: 1, kind: input, shape index: {}]
  %s2 = inlined_call_operand.vmem [shape: f32[30,7], index: 2, kind: input, shape index: {}]
  %s3 = inlined_call_operand.vmem [shape: s32[30,1], index: 3, kind: input, shape index: {}]
  %s4 = inlined_call_operand.hbm [shape: f32[2,8,128], index: 4, kind: output, shape index: {}]
  %s5 = sld [smem:[#allocation0]]
  $region57: #{tpu_custom_call.1} parent=0
    _
  %s7 = ssub.s32 1, %s5
  %s8 = scalar_select 0, %s7, %s5
  $region1: #{tpu_custom_call.1} parent=0
    #allocation3 [shape = 'u8[8192]{0}', space=vmem, size = 0x2000, scoped, tag = 'output window, operand 0']
    #allocation4 [shape = 's32[2]{0}', space=sflag, size = 0x8, scoped, tag = 'scoped memory for tpu_custom_call.1']
    %9 = vsyncpa [#allocation4], 0
    %s10 = scalar_lea.sflag [#allocation4], 1
    %11 = vsyncpa %s10, 0
    loop: start=0, step=1, limit=6
    $region2: #{tpu_custom_call.1} parent=1 // loop_pre_header
      _
    $region3: #{tpu_custom_call.1} parent=1 // loop_header
      %s13 = sphi 0, %s17
      %p14 = scmp.ge.s32.totalorder %s13, 6
      %s20 = sphi 0, %s32
      %s21 = sphi 0, %s28
      %s22 = sphi 0, %s20
      %s23 = sphi 0, %s21
      %s24 = sphi 0, %s22
      %s25 = sphi 0, %s23
      %s43 = sphi 0, %s45
      %s46 = sphi 0, %s43
      %s47 = sphi 0, %s46
      %s63 = sphi 0, %s47
      %s77 = sphi 0, %s79
      %s80 = sphi 0, %s77
      %s81 = sphi 0, %s80
      %s97 = sphi 0, %s81
      %s111 = sphi 0, %s113
      %s114 = sphi 0, %s111
      %s115 = sphi 0, %s114
      %s131 = sphi 0, %s115
      %s145 = sphi 0, %s147
      %s148 = sphi 0, %s145
      %s149 = sphi 0, %s148
      %s165 = sphi 0, %s149
      %s171 = sphi 0, %s173
      %s174 = sphi 0, %s171
      %s175 = sphi 0, %s174
      %s191 = sphi 0, %s175
    $region4: #{tpu_custom_call.1} parent=1 // loop_header_branch
      %16 = sbr.rel (%p14) target = $region8
    $region5: #{tpu_custom_call.1} parent=1 // loop_body
      %s18 = ssub.s32 %s13, 1
      %s19 = ssub.s32 %s13, 2
      %s26 = sadd.s32 1, %s21
      %p27 = scmp.ge.s32.totalorder %s26, 2
      %s28 = scalar_select %p27, 0, %s26
      %s29 = sadd.s32 1, %s20
      %s30 = scalar_select %p27, %s29, %s20
      %p31 = scmp.ge.s32.totalorder %s30, 2
      %s32 = scalar_select %p31, 0, %s30
      %s33 = smul.u32 %s20, 2
      %s34 = sadd.s32 %s33, %s21
      %p35 = scmp.lt.s32.totalorder %s34, 3
      %s36 = scalar_select %p35, %s34, 3
      %s37 = smul.u32 %s32, 2
      %s38 = sadd.s32 %s37, %s28
      %p39 = scmp.lt.s32.totalorder %s38, 3
      %s40 = scalar_select %p39, %s38, 3
      %s41 = ssub.s32 %s36, %s40
      %p42 = scmp.eq.s32.totalorder %s41, 0
      %s44 = sadd.s32 %s43, 1
      %s45 = scalar_select %p42, %s43, %s44
      %p48 = pneg %p42
      %p49 = scmp.eq.s32.totalorder %s13, 3
      %p50 = por %p48, %p49
      %p51 = scmp.ne.s32.totalorder %s43, %s46
      %p52 = scmp.eq.s32.totalorder %s13, 0
      %p53 = por %p51, %p52
      %p54 = scmp.ne.s32.totalorder %s43, %s46
      %p55 = scmp.eq.s32.totalorder %s18, 3
      %p56 = por %p54, %p55
      %p57 = scmp.ne.s32.totalorder %s46, %s47
      %p58 = scmp.eq.s32.totalorder %s18, 0
      %p59 = por %p57, %p58
      %p60 = scmp.ne.s32.totalorder %s46, %s47
      %p61 = scmp.eq.s32.totalorder %s19, 3
      %p62 = por %p60, %p61
      %p64 = scmp.ne.s32.totalorder %s47, %s63
      %p65 = scmp.eq.s32.totalorder %s19, 0
      %p66 = por %p64, %p65
      %s67 = smul.u32 %s20, 2
      %s68 = sadd.s32 %s67, %s21
      %p69 = scmp.lt.s32.totalorder %s68, 3
      %s70 = scalar_select %p69, %s68, 3
      %s71 = smul.u32 %s32, 2
      %s72 = sadd.s32 %s71, %s28
      %p73 = scmp.lt.s32.totalorder %s72, 3
      %s74 = scalar_select %p73, %s72, 3
      %s75 = ssub.s32 %s70, %s74
      %p76 = scmp.eq.s32.totalorder %s75, 0
      %s78 = sadd.s32 %s77, 1
      %s79 = scalar_select %p76, %s77, %s78
      %p82 = pneg %p76
      %p83 = scmp.eq.s32.totalorder %s13, 3
      %p84 = por %p82, %p83
      %p85 = scmp.ne.s32.totalorder %s77, %s80
      %p86 = scmp.eq.s32.totalorder %s13, 0
      %p87 = por %p85, %p86
      %p88 = scmp.ne.s32.totalorder %s77, %s80
      %p89 = scmp.eq.s32.totalorder %s18, 3
      %p90 = por %p88, %p89
      %p91 = scmp.ne.s32.totalorder %s80, %s81
      %p92 = scmp.eq.s32.totalorder %s18, 0
      %p93 = por %p91, %p92
      %p94 = scmp.ne.s32.totalorder %s80, %s81
      %p95 = scmp.eq.s32.totalorder %s19, 3
      %p96 = por %p94, %p95
      %p98 = scmp.ne.s32.totalorder %s81, %s97
      %p99 = scmp.eq.s32.totalorder %s19, 0
      %p100 = por %p98, %p99
      %s101 = smul.u32 %s20, 2
      %s102 = sadd.s32 %s101, %s21
      %p103 = scmp.lt.s32.totalorder %s102, 3
      %s104 = scalar_select %p103, %s102, 3
      %s105 = smul.u32 %s32, 2
      %s106 = sadd.s32 %s105, %s28
      %p107 = scmp.lt.s32.totalorder %s106, 3
      %s108 = scalar_select %p107, %s106, 3
      %s109 = ssub.s32 %s104, %s108
      %p110 = scmp.eq.s32.totalorder %s109, 0
      %s112 = sadd.s32 %s111, 1
      %s113 = scalar_select %p110, %s111, %s112
      %p116 = pneg %p110
      %p117 = scmp.eq.s32.totalorder %s13, 3
      %p118 = por %p116, %p117
      %p119 = scmp.ne.s32.totalorder %s111, %s114
      %p120 = scmp.eq.s32.totalorder %s13, 0
      %p121 = por %p119, %p120
      %p122 = scmp.ne.s32.totalorder %s111, %s114
      %p123 = scmp.eq.s32.totalorder %s18, 3
      %p124 = por %p122, %p123
      %p125 = scmp.ne.s32.totalorder %s114, %s115
      %p126 = scmp.eq.s32.totalorder %s18, 0
      %p127 = por %p125, %p126
      %p128 = scmp.ne.s32.totalorder %s114, %s115
      %p129 = scmp.eq.s32.totalorder %s19, 3
      %p130 = por %p128, %p129
      %p132 = scmp.ne.s32.totalorder %s115, %s131
      %p133 = scmp.eq.s32.totalorder %s19, 0
      %p134 = por %p132, %p133
      %s135 = smul.u32 %s20, 2
      %s136 = sadd.s32 %s135, %s21
      %p137 = scmp.lt.s32.totalorder %s136, 3
      %s138 = scalar_select %p137, %s136, 3
      %s139 = smul.u32 %s32, 2
      %s140 = sadd.s32 %s139, %s28
      %p141 = scmp.lt.s32.totalorder %s140, 3
      %s142 = scalar_select %p141, %s140, 3
      %s143 = ssub.s32 %s138, %s142
      %p144 = scmp.eq.s32.totalorder %s143, 0
      %s146 = sadd.s32 %s145, 1
      %s147 = scalar_select %p144, %s145, %s146
      %p150 = pneg %p144
      %p151 = scmp.eq.s32.totalorder %s13, 3
      %p152 = por %p150, %p151
      %p153 = scmp.ne.s32.totalorder %s145, %s148
      %p154 = scmp.eq.s32.totalorder %s13, 0
      %p155 = por %p153, %p154
      %p156 = scmp.ne.s32.totalorder %s145, %s148
      %p157 = scmp.eq.s32.totalorder %s18, 3
      %p158 = por %p156, %p157
      %p159 = scmp.ne.s32.totalorder %s148, %s149
      %p160 = scmp.eq.s32.totalorder %s18, 0
      %p161 = por %p159, %p160
      %p162 = scmp.ne.s32.totalorder %s148, %s149
      %p163 = scmp.eq.s32.totalorder %s19, 3
      %p164 = por %p162, %p163
      %p166 = scmp.ne.s32.totalorder %s149, %s165
      %p167 = scmp.eq.s32.totalorder %s19, 0
      %p168 = por %p166, %p167
      %s169 = ssub.s32 %s20, %s32
      %p170 = scmp.eq.s32.totalorder %s169, 0
      %s172 = sadd.s32 %s171, 1
      %s173 = scalar_select %p170, %s171, %s172
      %p176 = pneg %p170
      %p177 = scmp.eq.s32.totalorder %s13, 3
      %p178 = por %p176, %p177
      %p179 = scmp.ne.s32.totalorder %s171, %s174
      %p180 = scmp.eq.s32.totalorder %s13, 0
      %p181 = por %p179, %p180
      %p182 = scmp.ne.s32.totalorder %s171, %s174
      %p183 = scmp.eq.s32.totalorder %s18, 3
      %p184 = por %p182, %p183
      %p185 = scmp.ne.s32.totalorder %s174, %s175
      %p186 = scmp.eq.s32.totalorder %s18, 0
      %p187 = por %p185, %p186
      %p188 = scmp.ne.s32.totalorder %s174, %s175
      %p189 = scmp.eq.s32.totalorder %s19, 3
      %p190 = por %p188, %p189
      %p192 = scmp.ne.s32.totalorder %s175, %s191
      %p193 = scmp.eq.s32.totalorder %s19, 0
      %p194 = por %p192, %p193
      %p195 = scmp.le.s32.totalorder 1, %s13
      %p196 = scmp.lt.s32.totalorder %s13, 5
      %p197 = pnand %p195, %p196
      %p198 = pneg %p197
      // Predicated region
      $region9: #{tpu_custom_call.1} parent=5 // pred_check
        _
      $region10: #{tpu_custom_call.1} parent=5 // pred_check_branch
        %200 = sbr.rel (%p197) target = $region12
      $region11: #{tpu_custom_call.1} parent=5 // pred_region
        %s201 = ssub.s32 %s13, 1
      $region12: #{tpu_custom_call.1} parent=5 // pred_fallthru
        _
      %p202 = scmp.lt.s32.totalorder %s13, 4
      // Predicated region
      $region13: #{tpu_custom_call.1} parent=5 // pred_check
        %p203 = pneg %p202
      $region14: #{tpu_custom_call.1} parent=5 // pred_check_branch
        %205 = sbr.rel (%p203) target = $region16
      $region15: #{tpu_custom_call.1} parent=5 // pred_region
        // Predicated region
        $region17: #{tpu_custom_call.1} parent=15 // pred_check
          %p206 = pneg %p53
        $region18: #{tpu_custom_call.1} parent=15 // pred_check_branch
          %208 = sbr.rel (%p206) target = $region20
        $region19: #{tpu_custom_call.1} parent=15 // pred_region
          %s209 = smul.u32 %s20, 2
          %s210 = sadd.s32 %s209, %s21
          %p211 = scmp.lt.s32.totalorder %s210, 3
          %s212 = scalar_select %p211, %s210, 3
          %p213 = scmp.lt.s32.totalorder %s212, 3
          %s214 = scalar_select %p213, %s212, 3
          %s215 = smul.addr %s214, 8
          %s216 = scalar_lea.vmem %s0, %s215
          %s217 = smul.u32 %s20, 2
          %s218 = sadd.s32 %s217, %s21
          %p219 = scmp.lt.s32.totalorder %s218, 3
          %s220 = scalar_select %p219, %s218, 3
        $region20: #{tpu_custom_call.1} parent=15 // pred_fallthru
          _
        // Predicated region
        $region21: #{tpu_custom_call.1} parent=15 // pred_check
          %p221 = pneg %p87
        $region22: #{tpu_custom_call.1} parent=15 // pred_check_branch
          %223 = sbr.rel (%p221) target = $region24
        $region23: #{tpu_custom_call.1} parent=15 // pred_region
          %s224 = smul.u32 %s20, 2
          %s225 = sadd.s32 %s224, %s21
          %p226 = scmp.lt.s32.totalorder %s225, 3
          %s227 = scalar_select %p226, %s225, 3
          %p228 = scmp.lt.s32.totalorder %s227, 3
          %s229 = scalar_select %p228, %s227, 3
          %s230 = smul.addr %s229, 8
          %s231 = scalar_lea.vmem %s1, %s230
          %s232 = smul.u32 %s20, 2
          %s233 = sadd.s32 %s232, %s21
          %p234 = scmp.lt.s32.totalorder %s233, 3
          %s235 = scalar_select %p234, %s233, 3
        $region24: #{tpu_custom_call.1} parent=15 // pred_fallthru
          _
        // Predicated region
        $region25: #{tpu_custom_call.1} parent=15 // pred_check
          %p236 = pneg %p121
        $region26: #{tpu_custom_call.1} parent=15 // pred_check_branch
          %238 = sbr.rel (%p236) target = $region28
        $region27: #{tpu_custom_call.1} parent=15 // pred_region
          %s239 = smul.u32 %s20, 2
          %s240 = sadd.s32 %s239, %s21
          %p241 = scmp.lt.s32.totalorder %s240, 3
          %s242 = scalar_select %p241, %s240, 3
          %p243 = scmp.lt.s32.totalorder %s242, 3
          %s244 = scalar_select %p243, %s242, 3
          %s245 = smul.addr %s244, 8
          %s246 = scalar_lea.vmem %s2, %s245
          %s247 = smul.u32 %s20, 2
          %s248 = sadd.s32 %s247, %s21
          %p249 = scmp.lt.s32.totalorder %s248, 3
          %s250 = scalar_select %p249, %s248, 3
        $region28: #{tpu_custom_call.1} parent=15 // pred_fallthru
          _
        // Predicated region
        $region29: #{tpu_custom_call.1} parent=15 // pred_check
          %p251 = pneg %p155
        $region30: #{tpu_custom_call.1} parent=15 // pred_check_branch
          %253 = sbr.rel (%p251) target = $region32
        $region31: #{tpu_custom_call.1} parent=15 // pred_region
          %s254 = smul.u32 %s20, 2
          %s255 = sadd.s32 %s254, %s21
          %p256 = scmp.lt.s32.totalorder %s255, 3
          %s257 = scalar_select %p256, %s255, 3
          %p258 = scmp.lt.s32.totalorder %s257, 3
          %s259 = scalar_select %p258, %s257, 3
          %s260 = smul.addr %s259, 8
          %s261 = scalar_lea.vmem %s3, %s260
          %s262 = smul.u32 %s20, 2
          %s263 = sadd.s32 %s262, %s21
          %p264 = scmp.lt.s32.totalorder %s263, 3
          %s265 = scalar_select %p264, %s263, 3
        $region32: #{tpu_custom_call.1} parent=15 // pred_fallthru
          _
      $region16: #{tpu_custom_call.1} parent=5 // pred_fallthru
        _
      %p266 = scmp.le.s32.totalorder 1, %s13
      %p267 = scmp.lt.s32.totalorder %s13, 5
      %p268 = pnand %p266, %p267
      %p269 = pneg %p268
      // Predicated region
      $region33: #{tpu_custom_call.1} parent=5 // pred_check
        _
      $region34: #{tpu_custom_call.1} parent=5 // pred_check_branch
        %271 = sbr.rel (%p268) target = $region36
      $region35: #{tpu_custom_call.1} parent=5 // pred_region
        %s272 = ssub.s32 %s13, 1
        %s273 = smul.u32 %s22, 2
        %s274 = sadd.s32 %s273, %s23
        %p275 = scmp.lt.s32.totalorder %s274, 3
        %s276 = scalar_select %p275, %s274, 3
        %p277 = scmp.lt.s32.totalorder %s276, 3
        %s278 = scalar_select %p277, %s276, 3
        %s279 = smul.addr %s278, 8
        %s280 = scalar_lea.vmem %s0, %s279
        %p281 = pneg %p59
        %p282 = pneg %p56
        %s283 = smul.u32 %s22, 2
        %s284 = sadd.s32 %s283, %s23
        %p285 = scmp.lt.s32.totalorder %s284, 3
        %s286 = scalar_select %p285, %s284, 3
        %p287 = scmp.lt.s32.totalorder %s286, 3
        %s288 = scalar_select %p287, %s286, 3
        %s289 = smul.addr %s288, 8
        %s290 = scalar_lea.vmem %s1, %s289
        %p291 = pneg %p93
        %p292 = pneg %p90
        %s293 = smul.u32 %s22, 2
        %s294 = sadd.s32 %s293, %s23
        %p295 = scmp.lt.s32.totalorder %s294, 3
        %s296 = scalar_select %p295, %s294, 3
        %p297 = scmp.lt.s32.totalorder %s296, 3
        %s298 = scalar_select %p297, %s296, 3
        %s299 = smul.addr %s298, 8
        %s300 = scalar_lea.vmem %s2, %s299
        %p301 = pneg %p127
        %p302 = pneg %p124
        %s303 = smul.u32 %s22, 2
        %s304 = sadd.s32 %s303, %s23
        %p305 = scmp.lt.s32.totalorder %s304, 3
        %s306 = scalar_select %p305, %s304, 3
        %p307 = scmp.lt.s32.totalorder %s306, 3
        %s308 = scalar_select %p307, %s306, 3
        %s309 = smul.addr %s308, 8
        %s310 = scalar_lea.vmem %s3, %s309
        %p311 = pneg %p161
        %p312 = pneg %p158
        %p313 = pneg %p187
        %p314 = pneg %p184
        %s315 = sand.u32 %s174, 1
        %s316 = scalar_lea.sflag [#allocation4], %s315
        %s317 = sand.u32 %s174, 1
        %s318 = smul.addr %s317, 8
        %s319 = scalar_lea.vmem [#allocation3], %s318
        %s320 = smul.u32 %s22, 2
        %s321 = sadd.s32 %s320, %s23
        %p322 = scmp.lt.s32.totalorder %s321, 3
        %s323 = scalar_select %p322, %s321, 3
        %p324 = scmp.lt.s32.totalorder %s323, 3
        %s325 = scalar_select %p324, %s323, 3
        %s326 = smul.addr %s325, 8
        %s327 = scalar_lea.vmem %s0, %s326
        %s328 = smul.u32 %s22, 2
        %s329 = sadd.s32 %s328, %s23
        %p330 = scmp.lt.s32.totalorder %s329, 3
        %s331 = scalar_select %p330, %s329, 3
        %s332 = smul.u32 %s22, 2
        %s333 = sadd.s32 %s332, %s23
        %p334 = scmp.lt.s32.totalorder %s333, 3
        %s335 = scalar_select %p334, %s333, 3
        %p336 = scmp.lt.s32.totalorder %s335, 3
        %s337 = scalar_select %p336, %s335, 3
        %s338 = smul.addr %s337, 8
        %s339 = scalar_lea.vmem %s1, %s338
        %s340 = smul.u32 %s22, 2
        %s341 = sadd.s32 %s340, %s23
        %p342 = scmp.lt.s32.totalorder %s341, 3
        %s343 = scalar_select %p342, %s341, 3
        %s344 = smul.u32 %s22, 2
        %s345 = sadd.s32 %s344, %s23
        %p346 = scmp.lt.s32.totalorder %s345, 3
        %s347 = scalar_select %p346, %s345, 3
        %p348 = scmp.lt.s32.totalorder %s347, 3
        %s349 = scalar_select %p348, %s347, 3
        %s350 = smul.addr %s349, 8
        %s351 = scalar_lea.vmem %s2, %s350
        %s352 = smul.u32 %s22, 2
        %s353 = sadd.s32 %s352, %s23
        %p354 = scmp.lt.s32.totalorder %s353, 3
        %s355 = scalar_select %p354, %s353, 3
        %s356 = smul.u32 %s22, 2
        %s357 = sadd.s32 %s356, %s23
        %p358 = scmp.lt.s32.totalorder %s357, 3
        %s359 = scalar_select %p358, %s357, 3
        %p360 = scmp.lt.s32.totalorder %s359, 3
        %s361 = scalar_select %p360, %s359, 3
        %s362 = smul.addr %s361, 8
        %s363 = scalar_lea.vmem %s3, %s362
        %s364 = smul.u32 %s22, 2
        %s365 = sadd.s32 %s364, %s23
        %p366 = scmp.lt.s32.totalorder %s365, 3
        %s367 = scalar_select %p366, %s365, 3
        %p368 = scmp.eq.s32.totalorder %s23, 0
        // Predicated region
        $region37: #{tpu_custom_call.1} parent=35 // pred_check
          %p369 = pneg %p368
        $region38: #{tpu_custom_call.1} parent=35 // pred_check_branch
          %371 = sbr.rel (%p369) target = $region40
        $region39: #{tpu_custom_call.1} parent=35 // pred_region
          %s372 = scalar_lea.smem [#allocation2], 0
          %373 = sst [smem:[%s372]] 0.0
          %s374 = scalar_lea.smem [#allocation2], 1
          %375 = sst [smem:[%s374]] 0.0
          %s376 = scalar_lea.smem [#allocation2], 2
          %377 = sst [smem:[%s376]] 0.0
          %s378 = scalar_lea.smem [#allocation2], 3
          %379 = sst [smem:[%s378]] 0.0
          %s380 = scalar_lea.smem [#allocation2], 4
          %381 = sst [smem:[%s380]] 0.0
        $region40: #{tpu_custom_call.1} parent=35 // pred_fallthru
          _
        %v382 = vld [vmem:[%s327] sm:$0xff]
        %v383 = vld [vmem:[%s339] sm:$0xff]
        %v384 = vld [vmem:[%s351] sm:$0xff]
        %v385 = vld [vmem:[%s363] sm:$0xff]
        %s386 = smul.u32 %s22, 2
        %s387 = sadd.s32 %s386, %s23
        %s388 = smul.u32 %s387, 8
        %v389 = vlaneseq
        %v390 = vshrl.u32 %v389, 7
        %v391 = vstv %s388
        %v392 = vadd.s32 %v390, %v391
        %vm393 = vcmp.lt.s32.totalorder %v392, 30
        %v394 = vsel %vm393, 1, 0
        %v395 = vcvt.s32.f32 %v394
        %vm396 = vcmp.eq.s32.totalorder %v394, 1
        %v397 = vsel %vm396, %v382, 0.0
        %v398 = vsel %vm396, %v383, 0.0
        %v399 = vsel %vm396, %v384, 0.0
        %v400 = vsel %vm393, %v385, 0
        %vm401 = vcmask 48128
        %v402 = vsel %vm401, %v397, -inf
        %403 = vmax.xlane.f32.xlu0 %v402
        %v404 = vpop.xlane.xlu0 %403
        %v405 = vsub.f32 %v397, %v404
        %v406 = vmul.f32 %v405, 1.442695
        %v407 = vpow.pop %v406
        %v408 = vsel %vm401, %v407, 0.0
        %409 = vadd.xlane.f32.xlu0 %v408
        %v410 = vpop.xlane.xlu0 %409
        %v411 = vlog2.pop %v410
        %v412 = vmul.f32 %v411, 0.6931472
        %v413 = vadd.f32 %v412, %v404
        %v414 = vlaneseq
        %v415 = vand.u32 %v414, 127
        %416 = vset.pattern.permute.xlu0 0
        %417 = vperm.xlu0 %416, %v400
        %v418 = vpop.permute.xlu0 %417
        %vm419 = vcmp.eq.s32.totalorder %v415, %v418
        %v420 = vsel %vm419, %v397, 0.0
        %v421 = vsel %vm401, %v420, 0.0
        %422 = vadd.xlane.f32.xlu0 %v421
        %v423 = vpop.xlane.xlu0 %422
        %v424 = vsub.f32 %v413, %v423
        %v425 = vmul.f32 %v424, %v395
        %vm426 = vcmask 7168
        %v427 = vsel %vm426, %v425, 0.0
        %428 = vadd.xlane.f32.xlu0 %v427
        %v429 = vpop.xlane.xlu0 %428
        %v430 = vrot.slane %v429, 4
        %v431 = vadd.f32 %v429, %v430
        %v432 = vrot.slane %v431, 2
        %v433 = vadd.f32 %v431, %v432
        %v434 = vrot.slane %v433, 1
        %v435 = vadd.f32 %v433, %v434
        %s436 = vtos %v435
        %v437 = vsel %vm419, %v398, 0.0
        %v438 = vsel %vm401, %v437, 0.0
        %439 = vadd.xlane.f32.xlu0 %v438
        %v440 = vpop.xlane.xlu0 %439
        %v441 = vsub.f32 %v440, %v398
        %v442 = vmax.f32 %v441, 0.0
        %v443 = vsel %vm401, %v442, 0.0
        %444 = vadd.xlane.f32.xlu0 %v443
        %v445 = vpop.xlane.xlu0 %444
        %v446 = vmul.f32 %v440, %v395
        %v447 = vsel %vm426, %v446, 0.0
        %448 = vadd.xlane.f32.xlu0 %v447
        %v449 = vpop.xlane.xlu0 %448
        %v450 = vrot.slane %v449, 4
        %v451 = vadd.f32 %v449, %v450
        %v452 = vrot.slane %v451, 2
        %v453 = vadd.f32 %v451, %v452
        %v454 = vrot.slane %v453, 1
        %v455 = vadd.f32 %v453, %v454
        %s456 = vtos %v455
        %v457 = vmul.f32 %v445, %v395
        %v458 = vsel %vm426, %v457, 0.0
        %459 = vadd.xlane.f32.xlu0 %v458
        %v460 = vpop.xlane.xlu0 %459
        %v461 = vrot.slane %v460, 4
        %v462 = vadd.f32 %v460, %v461
        %v463 = vrot.slane %v462, 2
        %v464 = vadd.f32 %v462, %v463
        %v465 = vrot.slane %v464, 1
        %v466 = vadd.f32 %v464, %v465
        %s467 = vtos %v466
        %469 = vset.pattern.permute.xlu0 6
        %470 = vperm.xlu0 %469, %v399
        %v471 = vpop.permute.xlu0 %470
        %v473 = vsub.f32 %v471, %v399
        %v474 = vmax.f32 %v473, 0.0
        %vm475 = vcmask 56320
        %v476 = vsel %vm475, %v474, 0.0
        %477 = vadd.xlane.f32.xlu0 %v476
        %v478 = vpop.xlane.xlu0 %477
        %v479 = vmul.f32 %v399, %v395
        %481 = vrot.lane.b32.xlu0 %v479, 122
        %v482 = vpop.permute.xlu0 %481
        %v484 = vsel %vm426, %v482, 0.0
        %485 = vadd.xlane.f32.xlu0 %v484
        %v486 = vpop.xlane.xlu0 %485
        %v487 = vrot.slane %v486, 4
        %v488 = vadd.f32 %v486, %v487
        %v489 = vrot.slane %v488, 2
        %v490 = vadd.f32 %v488, %v489
        %v491 = vrot.slane %v490, 1
        %v492 = vadd.f32 %v490, %v491
        %s493 = vtos %v492
        %v494 = vmul.f32 %v478, %v395
        %v495 = vsel %vm426, %v494, 0.0
        %496 = vadd.xlane.f32.xlu0 %v495
        %v497 = vpop.xlane.xlu0 %496
        %v498 = vrot.slane %v497, 4
        %v499 = vadd.f32 %v497, %v498
        %v500 = vrot.slane %v499, 2
        %v501 = vadd.f32 %v499, %v500
        %v502 = vrot.slane %v501, 1
        %v503 = vadd.f32 %v501, %v502
        %s504 = vtos %v503
        %s505 = sld [smem:[#allocation2]]
        %s506 = sadd.f32 %s505, %s436
        %s507 = scalar_lea.smem [#allocation2], 0
        %508 = sst [smem:[%s507]] %s506
        %s509 = sld [smem:[#allocation2 + $0x1]]
        %s510 = sadd.f32 %s509, %s456
        %s511 = scalar_lea.smem [#allocation2], 1
        %512 = sst [smem:[%s511]] %s510
        %s513 = sld [smem:[#allocation2 + $0x2]]
        %s514 = sadd.f32 %s513, %s467
        %s515 = scalar_lea.smem [#allocation2], 2
        %516 = sst [smem:[%s515]] %s514
        %s517 = sld [smem:[#allocation2 + $0x3]]
        %s518 = sadd.f32 %s517, %s493
        %s519 = scalar_lea.smem [#allocation2], 3
        %520 = sst [smem:[%s519]] %s518
        %s521 = sld [smem:[#allocation2 + $0x4]]
        %s522 = sadd.f32 %s521, %s504
        %s523 = scalar_lea.smem [#allocation2], 4
        %524 = sst [smem:[%s523]] %s522
        %p525 = scmp.eq.s32.totalorder %s23, 1
        // Predicated region
        $region41: #{tpu_custom_call.1} parent=35 // pred_check
          %p526 = pneg %p525
        $region42: #{tpu_custom_call.1} parent=35 // pred_check_branch
          %528 = sbr.rel (%p526) target = $region44
        $region43: #{tpu_custom_call.1} parent=35 // pred_region
          %s529 = sld [smem:[#allocation2]]
          %s530 = smul.f32 %s529, 0.033333335
          %s531 = sld [smem:[#allocation2 + $0x1]]
          %s532 = smul.f32 %s531, 0.033333335
          %s533 = sld [smem:[#allocation2 + $0x2]]
          %s534 = smul.f32 %s533, 0.006666667
          %s535 = sld [smem:[#allocation2 + $0x3]]
          %s536 = smul.f32 %s535, 0.033333335
          %s537 = sld [smem:[#allocation2 + $0x4]]
          %s538 = smul.f32 %s537, 0.0055555557
          %s539 = sadd.f32 %s530, %s532
          %s540 = sadd.f32 %s539, %s534
          %s541 = sadd.f32 %s540, %s536
          %s542 = sadd.f32 %s541, %s538
          %vm543 = vcmp.eq.s32.totalorder %v390, 0
          %v544 = vstv %s542
          %v545 = vsel %vm543, %v544, 0.0
          %vm546 = vcmp.eq.s32.totalorder %v390, 1
          %v547 = vstv %s530
          %v548 = vsel %vm546, %v547, 0.0
          %v549 = vadd.f32 %v545, %v548
          %vm550 = vcmp.eq.s32.totalorder %v390, 2
          %v551 = vstv %s532
          %v552 = vsel %vm550, %v551, 0.0
          %v553 = vadd.f32 %v549, %v552
          %vm554 = vcmp.eq.s32.totalorder %v390, 3
          %v555 = vstv %s534
          %v556 = vsel %vm554, %v555, 0.0
          %v557 = vadd.f32 %v553, %v556
          %vm558 = vcmp.eq.s32.totalorder %v390, 4
          %v559 = vstv %s536
          %v560 = vsel %vm558, %v559, 0.0
          %v561 = vadd.f32 %v557, %v560
          %vm562 = vcmp.eq.s32.totalorder %v390, 5
          %v563 = vstv %s538
          %v564 = vsel %vm562, %v563, 0.0
          %v565 = vadd.f32 %v561, %v564
          %566 = vst [vmem:[%s319] sm:$0xff] %v565
        $region44: #{tpu_custom_call.1} parent=35 // pred_fallthru
          _
        %s567 = sand.u32 %s174, 1
        %s568 = scalar_lea.sflag [#allocation4], %s567
        %s569 = sand.u32 %s174, 1
        %s570 = smul.addr %s569, 8
        %s571 = scalar_lea.vmem [#allocation3], %s570
        // Predicated region
        $region45: #{tpu_custom_call.1} parent=35 // pred_check
          %p572 = pneg %p184
        $region46: #{tpu_custom_call.1} parent=35 // pred_check_branch
          %574 = sbr.rel (%p572) target = $region48
        $region47: #{tpu_custom_call.1} parent=35 // pred_region
          %s576 = ssub.s32 128, 128
          %577 = vsyncadd %s568, %s576
          %s578 = smul.addr %s22, 128
          %s579 = scalar_lea.hbm %s4, %s578
          %s581 = sshll.u32 %s571, 4
          %s582 = int_to_ptr.vmem [resolvable:$true] %s581
          %584 = dma.vmem_to_hbm [thread:$0]  %s582, 128, %s579, %s568
        $region48: #{tpu_custom_call.1} parent=35 // pred_fallthru
          _
      $region36: #{tpu_custom_call.1} parent=5 // pred_fallthru
        _
      %p585 = scmp.le.s32.totalorder 2, %s13
      // Predicated region
      $region49: #{tpu_custom_call.1} parent=5 // pred_check
        %p586 = pneg %p585
      $region50: #{tpu_custom_call.1} parent=5 // pred_check_branch
        %588 = sbr.rel (%p586) target = $region52
      $region51: #{tpu_custom_call.1} parent=5 // pred_region
        %s589 = ssub.s32 %s13, 2
        // Predicated region
        $region53: #{tpu_custom_call.1} parent=51 // pred_check
          %p590 = pneg %p190
        $region54: #{tpu_custom_call.1} parent=51 // pred_check_branch
          %592 = sbr.rel (%p590) target = $region56
        $region55: #{tpu_custom_call.1} parent=51 // pred_region
          %s593 = sand.u32 %s175, 1
          %s594 = scalar_lea.sflag [#allocation4], %s593
          %s595 = sand.u32 %s175, 1
          %s596 = smul.addr %s595, 8
          %s597 = scalar_lea.vmem [#allocation3], %s596
          %598 = dma.done %s594, 128
        $region56: #{tpu_custom_call.1} parent=51 // pred_fallthru
          _
      $region52: #{tpu_custom_call.1} parent=5 // pred_fallthru
        _
    $region6: #{tpu_custom_call.1} parent=1 // loop_footer
      %s17 = sadd.s32 1, %s13
    $region7: #{tpu_custom_call.1} parent=1 // loop_footer_branch
      %12 = sbr.rel target = $region3
    $region8: #{tpu_custom_call.1} parent=1 // loop_exit
      _
    %599 = vsyncpa [#allocation4], 1
    %s600 = scalar_lea.sflag [#allocation4], 1
    %601 = vsyncpa %s600, 1

</llo_original>
